<compile_context>
chip_gen: v7x
topology: tpu7x:2x2x1
jax: 0.10.0
libtpu: 0.0.40
codegen_flags: <defaults>
</compile_context>

<pallas_src>
import functools
import math
from typing import NamedTuple

import jax
import jax.numpy as jnp
from jax.experimental import pallas as pl
from jax.experimental.pallas import tpu as pltpu


def _round_up(x, m):
    return (x + m - 1) // m * m


def _pick_tile(padded, cap, unit):
    """Largest multiple of `unit` that divides `padded` and is <= cap."""
    t = max(unit, min(cap, padded) // unit * unit)
    while padded % t:
        t -= unit
    return t


def _pick_tn(n_pad, tn_max):
    tn = _pick_tile(n_pad, tn_max, 128)
    # Megacore guard (v7x has 2 TensorCores): keep >= 2 N blocks whenever
    # possible so both cores get output tiles even if the M grid is 1 block.
    if n_pad // tn < 2 and n_pad >= 256:
        tn = _pick_tile(n_pad, tn // 2, 128)
    return tn


def _pick_tm(m, tm_max=512, tm_min=256):
    """Multiple of 16 (bf16 sublane packing) that minimizes M padding."""
    m16 = _round_up(max(m, 1), 16)
    if m16 <= tm_max:
        return m16, m16                      # single M block, minimal padding
    best_tm, best_pad = tm_max, _round_up(m16, tm_max)
    for tm in range(tm_max - 16, tm_min - 1, -16):
        m_pad = _round_up(m16, tm)
        if m_pad < best_pad:
            best_tm, best_pad = tm, m_pad
    return best_tm, best_pad


class FCParams(NamedTuple):
    w_kn: jax.Array    # (k_pad, n_pad) weight, transposed to (in, out), padded, compute dtype
    b_n: jax.Array     # (1, n_pad) bias, float32
    in_size: int
    out_size: int
    tn: int
    tk: int


def prepare_fc_params(weight, bias, *, tn_max=512, tk_max=1024,
                      compute_dtype=jnp.bfloat16):
    """One-time weight prep: transpose to (K, N), zero-pad to tile multiples, cast.

    weight: (out_size, in_size)   -- native PyTorch nn.Linear layout
    bias:   (out_size,)

    Doing this once at param-load time removes the per-forward jnp.pad /
    transpose HBM pass over the weight (the dominant HBM traffic for small-M
    FC layers).  bf16 storage also halves weight HBM bytes and hits the MXU's
    native bf16 throughput.
    """
    # TODO(synk): optional fp8 (v7x) / int8 (v5e, v6e) weight-quantization path.
    out_size, in_size = weight.shape
    n_pad = _round_up(out_size, 128)
    k_pad = _round_up(in_size, 128)
    tn = _pick_tn(n_pad, tn_max)
    tk = _pick_tile(k_pad, tk_max, 128)

    w_kn = jnp.transpose(weight)                          # (in, out): K-major RHS
    w_kn = jnp.pad(w_kn, ((0, k_pad - in_size), (0, n_pad - out_size)))
    w_kn = w_kn.astype(compute_dtype)

    b_n = jnp.pad(bias.astype(jnp.float32), (0, n_pad - out_size)).reshape(1, n_pad)
    return FCParams(w_kn, b_n, int(in_size), int(out_size), int(tn), int(tk))


def _fc_kernel(x_ref, w_ref, b_ref, o_ref, acc_ref, *, use_relu):
    """One (tm, tn) output tile, accumulated over the K grid axis.

    x_ref:   (tm, tk)  activation tile (compute dtype, e.g. bf16)
    w_ref:   (tk, tn)  weight tile in (K, N) layout -> plain x @ W, no XLU transpose
    b_ref:   (1, tn)   bias tile (f32)
    o_ref:   (tm, tn)  output tile (constant over K -> resident across K steps)
    acc_ref: (tm, tn)  f32 scratch accumulator
    """
    k = pl.program_id(2)

    @pl.when(k == 0)
    def _():
        acc_ref[...] = jnp.zeros_like(acc_ref)

    acc_ref[...] += jnp.dot(x_ref[...], w_ref[...],
                            preferred_element_type=jnp.float32)

    @pl.when(k == pl.num_programs(2) - 1)
    def _():
        acc = acc_ref[...] + b_ref[...]
        if use_relu:
            acc = jnp.maximum(acc, 0.0)
        o_ref[...] = acc.astype(o_ref.dtype)


def fc_forward(x, params: FCParams, *, dropout=0.0, use_relu=True,
               training=False, tm_max=512):
    """Pallas implementation of FC.forward.

    x: (..., in_size).  Eval-mode dropout is identity (matches nn.Dropout.eval()).
    """
    if training and dropout > 0.0:
        # TODO(synk): training-mode dropout needs an in-kernel pltpu.prng_seed /
        # prng_random_bits mask; eval-mode dropout is identity so it is omitted.
        raise NotImplementedError("training-mode dropout not implemented")

    in_size = x.shape[-1]
    assert in_size == params.in_size, (in_size, params.in_size)
    out_size = params.out_size
    k_pad, n_pad = params.w_kn.shape
    tn, tk = params.tn, params.tk
    compute_dtype = params.w_kn.dtype

    lead_shape = x.shape[:-1]
    m = math.prod(lead_shape) if lead_shape else 1
    tm, m_pad = _pick_tm(m, tm_max)

    # Cast activations to the compute dtype (bf16 MXU feed) and zero-pad to
    # tile multiples; padded rows/cols contribute nothing to the matmul and the
    # padded output region is sliced off below.  Keeps output stores lane-dense.
    x2d = x.reshape(m, in_size).astype(compute_dtype)
    if (m_pad, k_pad) != (m, in_size):
        x2d = jnp.pad(x2d, ((0, m_pad - m), (0, k_pad - in_size)))

    grid = (m_pad // tm, n_pad // tn, k_pad // tk)

    out2d = pl.pallas_call(
        functools.partial(_fc_kernel, use_relu=use_relu),
        out_shape=jax.ShapeDtypeStruct((m_pad, n_pad), x.dtype),
        grid_spec=pltpu.PrefetchScalarGridSpec(
            num_scalar_prefetch=0,
            grid=grid,
            in_specs=[
                pl.BlockSpec((tm, tk), lambda i, j, k: (i, k)),    # x
                pl.BlockSpec((tk, tn), lambda i, j, k: (k, j)),    # W in (K, N)
                pl.BlockSpec((1, tn), lambda i, j, k: (0, j)),     # bias
            ],
            out_specs=pl.BlockSpec((tm, tn), lambda i, j, k: (i, j)),
            scratch_shapes=[pltpu.VMEM((tm, tn), jnp.float32)],
        ),
        compiler_params=pltpu.CompilerParams(
            dimension_semantics=("parallel", "parallel", "arbitrary"),
            # Lift the scoped-VMEM ceiling above v5e's 16 MiB default so the
            # larger tiles never force a compile failure / tile shrink there;
            # 48 MiB also stays within v7x's 64 MiB physical VMEM.
            vmem_limit_bytes=48 * 1024 * 1024,
        ),
    )(x2d, params.w_kn, params.b_n)

    out2d = out2d[:m, :out_size]
    return out2d.reshape(*lead_shape, out_size)


def init_fc_params(key, in_size, out_size, dtype=jnp.float32):
    """Deterministic init matching nn.Linear's default: U(-1/sqrt(in), 1/sqrt(in))."""
    kw, kb = jax.random.split(key)
    bound = 1.0 / math.sqrt(in_size)
    weight = jax.random.uniform(kw, (out_size, in_size), dtype, -bound, bound)
    bias = jax.random.uniform(kb, (out_size,), dtype, -bound, bound)
    return weight, bias


if __name__ == "__main__":
    key = jax.random.PRNGKey(0)
    kx, kp, kx2, kp2, kx3, kp3 = jax.random.split(key, 6)

    def reference(x, weight, bias, use_relu, compute_dtype=jnp.bfloat16):
        # Mirrors the kernel numerics: bf16 operands, f32 accumulate, f32 bias.
        y = jnp.einsum("...i,oi->...o", x.astype(compute_dtype),
                       weight.astype(compute_dtype),
                       preferred_element_type=jnp.float32)
        y = y + bias.astype(jnp.float32)
        if use_relu:
            y = jnp.maximum(y, 0.0)
        return y.astype(x.dtype)

    # 1) small FC: batch=2, seq=8, in_size=32 -> out_size=64
    x = jax.random.normal(kx, (2, 8, 32), jnp.float32)
    w, b = init_fc_params(kp, 32, 64)
    params = prepare_fc_params(w, b)
    out = jax.block_until_ready(fc_forward(x, params, dropout=0.0, use_relu=True))
    assert out.shape == (2, 8, 64)
    assert jnp.allclose(out, reference(x, w, b, True), atol=5e-3, rtol=5e-3), \
        "mismatch vs reference (small case)"

    # 2) ragged shapes needing real M/N/K padding and multiple N blocks
    x2 = jax.random.normal(kx2, (3, 40, 200), jnp.float32)
    w2, b2 = init_fc_params(kp2, 200, 300)
    p2 = prepare_fc_params(w2, b2)
    out2 = jax.block_until_ready(fc_forward(x2, p2, use_relu=True))
    assert out2.shape == (3, 40, 300)
    assert jnp.allclose(out2, reference(x2, w2, b2, True), atol=5e-3, rtol=5e-3), \
        "mismatch vs reference (padded case)"

    # 3) wide input: exercises multi-step K accumulation (k_pad=1536 -> tk=768)
    x3 = jax.random.normal(kx3, (2, 8, 1536), jnp.float32)
    w3, b3 = init_fc_params(kp3, 1536, 512)
    p3 = prepare_fc_params(w3, b3)
    out3 = jax.block_until_ready(fc_forward(x3, p3, use_relu=False))
    assert out3.shape == (2, 8, 512)
    assert jnp.allclose(out3, reference(x3, w3, b3, False), atol=5e-3, rtol=5e-3), \
        "mismatch vs reference (multi-K case)"

    print("KERNEL_OK")
</pallas_src>

<mosaic_0001>
module attributes {stable_mosaic.version = 11 : i64} {
  func.func @_fc_kernel(%arg0: i32, %arg1: i32, %arg2: i32, %arg3: memref<16x128xbf16, #tpu.memory_space<vmem>>, %arg4: memref<128x128xbf16, #tpu.memory_space<vmem>>, %arg5: memref<1x128xf32, #tpu.memory_space<vmem>>, %arg6: memref<16x128xf32, #tpu.memory_space<vmem>>, %arg7: memref<16x128xf32, #tpu.memory_space<vmem>>) attributes {dimension_semantics = [#tpu.dimension_semantics<parallel>, #tpu.dimension_semantics<parallel>, #tpu.dimension_semantics<arbitrary>], iteration_bounds = array<i64: 1, 1, 1>, scalar_prefetch = 0 : i64, scratch_operands = 1 : i64, tpu.core_type = #tpu.core_type<tc>, window_params = [{transform_indices = @transform_0, window_bounds = array<i64: 16, 128>}, {transform_indices = @transform_1, window_bounds = array<i64: 128, 128>}, {transform_indices = @transform_2, window_bounds = array<i64: 1, 128>}, {transform_indices = @transform_3, window_bounds = array<i64: 16, 128>}]} {
    %c0_i32 = arith.constant 0 : i32
    %0 = arith.cmpi eq, %arg2, %c0_i32 : i32
    %1 = arith.extui %0 : i1 to i32
    %c0_i32_0 = arith.constant 0 : i32
    %2 = arith.cmpi ne, %1, %c0_i32_0 : i32
    scf.if %2 {
      %cst_10 = arith.constant 0.000000e+00 : f32
      %12 = vector.broadcast %cst_10 : f32 to vector<16x128xf32>
      %c0_11 = arith.constant 0 : index
      %c0_12 = arith.constant 0 : index
      %13 = vector.load %arg7[%c0_11, %c0_12] : memref<16x128xf32, #tpu.memory_space<vmem>>, vector<16x128xf32>
      tpu.vector_store %arg7[%c0_11, %c0_12], %12 {strides = array<i32>} : memref<16x128xf32, #tpu.memory_space<vmem>>, vector<16x128xf32>,
    } else {
    }
    %c0 = arith.constant 0 : index
    %c0_1 = arith.constant 0 : index
    %3 = vector.load %arg7[%c0, %c0_1] : memref<16x128xf32, #tpu.memory_space<vmem>>, vector<16x128xf32>
    %c0_2 = arith.constant 0 : index
    %c0_3 = arith.constant 0 : index
    %4 = vector.load %arg3[%c0_2, %c0_3] : memref<16x128xbf16, #tpu.memory_space<vmem>>, vector<16x128xbf16>
    %c0_4 = arith.constant 0 : index
    %c0_5 = arith.constant 0 : index
    %5 = vector.load %arg4[%c0_4, %c0_5] : memref<128x128xbf16, #tpu.memory_space<vmem>>, vector<128x128xbf16>
    %cst = arith.constant dense<0.000000e+00> : vector<16x128xf32>
    %6 = tpu.matmul %4, %5, %cst {dimension_numbers = #tpu.dot_dimension_numbers<[1], [0], [0], [1], [0, 0, 1, 1], [], []>} : vector<16x128xbf16>, vector<128x128xbf16>, vector<16x128xf32> -> vector<16x128xf32>
    %7 = arith.addf %3, %6 : vector<16x128xf32>
    %c0_6 = arith.constant 0 : index
    %c0_7 = arith.constant 0 : index
    %8 = vector.load %arg7[%c0_6, %c0_7] : memref<16x128xf32, #tpu.memory_space<vmem>>, vector<16x128xf32>
    tpu.vector_store %arg7[%c0_6, %c0_7], %7 {strides = array<i32>} : memref<16x128xf32, #tpu.memory_space<vmem>>, vector<16x128xf32>,
    %c0_i32_8 = arith.constant 0 : i32
    %9 = arith.cmpi eq, %arg2, %c0_i32_8 : i32
    %10 = arith.extui %9 : i1 to i32
    %c0_i32_9 = arith.constant 0 : i32
    %11 = arith.cmpi ne, %10, %c0_i32_9 : i32
    scf.if %11 {
      %c0_10 = arith.constant 0 : index
      %c0_11 = arith.constant 0 : index
      %12 = vector.load %arg7[%c0_10, %c0_11] : memref<16x128xf32, #tpu.memory_space<vmem>>, vector<16x128xf32>
      %c0_12 = arith.constant 0 : index
      %c0_13 = arith.constant 0 : index
      %13 = vector.load %arg5[%c0_12, %c0_13] : memref<1x128xf32, #tpu.memory_space<vmem>>, vector<1x128xf32>
      %14 = vector.broadcast %13 : vector<1x128xf32> to vector<16x128xf32>
      %15 = arith.addf %12, %14 : vector<16x128xf32>
      %cst_14 = arith.constant 0.000000e+00 : f32
      %16 = vector.broadcast %cst_14 : f32 to vector<16x128xf32>
      %17 = arith.maximumf %15, %16 : vector<16x128xf32>
      %c0_15 = arith.constant 0 : index
      %c0_16 = arith.constant 0 : index
      %18 = vector.load %arg6[%c0_15, %c0_16] : memref<16x128xf32, #tpu.memory_space<vmem>>, vector<16x128xf32>
      tpu.vector_store %arg6[%c0_15, %c0_16], %17 {strides = array<i32>} : memref<16x128xf32, #tpu.memory_space<vmem>>, vector<16x128xf32>,
    } else {
    }
    return
  }
  func.func @transform_0(%arg0: i32, %arg1: i32, %arg2: i32) -> (i32, i32) {
    %c0_i32 = arith.constant 0 : i32
    return %arg0, %arg2 : i32, i32
  }
  func.func @transform_1(%arg0: i32, %arg1: i32, %arg2: i32) -> (i32, i32) {
    %c0_i32 = arith.constant 0 : i32
    return %arg2, %arg1 : i32, i32
  }
  func.func @transform_2(%arg0: i32, %arg1: i32, %arg2: i32) -> (i32, i32) {
    %c0_i32 = arith.constant 0 : i32
    %c0_i32_0 = arith.constant 0 : i32
    return %c0_i32, %arg1 : i32, i32
  }
  func.func @transform_3(%arg0: i32, %arg1: i32, %arg2: i32) -> (i32, i32) {
    %c0_i32 = arith.constant 0 : i32
    return %arg0, %arg1 : i32, i32
  }
}

</mosaic_0001>

<llo_original>
// kernel: tpu_custom_call.1
$region0: #{tpu_custom_call.1}
  #allocation0 [shape = 'u32[]', space=smem, size = 0x4, offset = 0x4, fixed_abs, tag = 'smem constant byte address 0x4 - core index']
  #allocation1 [shape = 'u32[144,128]{1,0:T(1,128)}', space=vmem, size = 0x12000, scoped, tag = 'internal scratch']
  #allocation2 [shape = 'f32[16,128]{1,0:T(8,128)}', space=vmem, size = 0x2000, scoped, tag = 'scratch operand']
  %s0 = inlined_call_operand.hbm [shape: bf16[16,128], index: 0, kind: input, shape index: {}]
  %s1 = inlined_call_operand.hbm [shape: bf16[128,128], index: 1, kind: input, shape index: {}]
  %s2 = inlined_call_operand.vmem [shape: f32[1,128], index: 2, kind: input, shape index: {}]
  %s3 = inlined_call_operand.hbm [shape: f32[16,128], index: 3, kind: output, shape index: {}]
  %s4 = sld [smem:[#allocation0]]
  $region38: #{tpu_custom_call.1} parent=0
    _
  %s6 = ssub.s32 1, %s4
  %s7 = scalar_select 0, %s6, %s4
  $region1: #{tpu_custom_call.1} parent=0
    #allocation3 [shape = 'u8[4096]{0}', space=vmem, size = 0x1000, scoped, tag = 'input window, operand 0, single buffered']
    #allocation4 [shape = 's32[1]{0}', space=sflag, size = 0x4, scoped, tag = 'scoped memory for tpu_custom_call.1']
    #allocation5 [shape = 's32[1]{0}', space=sflag, size = 0x4, scoped, tag = 'scoped memory for tpu_custom_call.1']
    #allocation6 [shape = 'u8[32768]{0}', space=vmem, size = 0x8000, scoped, tag = 'input window, operand 1, single buffered']
    #allocation7 [shape = 's32[1]{0}', space=sflag, size = 0x4, scoped, tag = 'scoped memory for tpu_custom_call.1']
    #allocation8 [shape = 'u8[8192]{0}', space=vmem, size = 0x2000, scoped, tag = 'output window, operand 0, single buffered']
    %8 = vsyncpa [#allocation4], 0
    %9 = vsyncpa [#allocation7], 0
    %10 = vsyncpa [#allocation5], 0
    // Predicated region
    $region2: #{tpu_custom_call.1} parent=1 // pred_check
      _
    $region3: #{tpu_custom_call.1} parent=1 // pred_check_branch
      %12 = sbr.rel (0) target = $region5
    $region4: #{tpu_custom_call.1} parent=1 // pred_region
      %s14 = ssub.s32 128, 128
      %15 = vsyncadd [#allocation4], %s14
      %s16 = sshll.u32 [#allocation3], 4
      %s17 = int_to_ptr.vmem [resolvable:$true] %s16
      %22 = dma.hbm_to_vmem [thread:$0]  %s0, 128, %s17, [#allocation4], 64, 64, 4
    $region5: #{tpu_custom_call.1} parent=1 // pred_fallthru
      _
    // Predicated region
    $region6: #{tpu_custom_call.1} parent=1 // pred_check
      _
    $region7: #{tpu_custom_call.1} parent=1 // pred_check_branch
      %24 = sbr.rel (0) target = $region9
    $region8: #{tpu_custom_call.1} parent=1 // pred_region
      %s26 = ssub.s32 1024, 1024
      %27 = vsyncadd [#allocation7], %s26
      %s28 = sshll.u32 [#allocation6], 4
      %s29 = int_to_ptr.vmem [resolvable:$true] %s28
      %34 = dma.hbm_to_vmem [thread:$0]  %s1, 1024, %s29, [#allocation7], 64, 64, 4
    $region9: #{tpu_custom_call.1} parent=1 // pred_fallthru
      _
    // Predicated region
    $region10: #{tpu_custom_call.1} parent=1 // pred_check
      _
    $region11: #{tpu_custom_call.1} parent=1 // pred_check_branch
      %36 = sbr.rel (0) target = $region13
    $region12: #{tpu_custom_call.1} parent=1 // pred_region
      _
    $region13: #{tpu_custom_call.1} parent=1 // pred_fallthru
      _
    // Predicated region
    $region14: #{tpu_custom_call.1} parent=1 // pred_check
      _
    $region15: #{tpu_custom_call.1} parent=1 // pred_check_branch
      %38 = sbr.rel (0) target = $region17
    $region16: #{tpu_custom_call.1} parent=1 // pred_region
      %39 = dma.done [#allocation4], 128
    $region17: #{tpu_custom_call.1} parent=1 // pred_fallthru
      _
    // Predicated region
    $region18: #{tpu_custom_call.1} parent=1 // pred_check
      _
    $region19: #{tpu_custom_call.1} parent=1 // pred_check_branch
      %41 = sbr.rel (0) target = $region21
    $region20: #{tpu_custom_call.1} parent=1 // pred_region
      %42 = dma.done [#allocation7], 1024
    $region21: #{tpu_custom_call.1} parent=1 // pred_fallthru
      _
    %p44 = scmp.eq.s32.totalorder 0, 0
    // Predicated region
    $region22: #{tpu_custom_call.1} parent=1 // pred_check
      %p45 = pneg %p44
    $region23: #{tpu_custom_call.1} parent=1 // pred_check_branch
      %47 = sbr.rel (%p45) target = $region25
    $region24: #{tpu_custom_call.1} parent=1 // pred_region
      %48 = vst [vmem:[#allocation2] sm:$0xff] 0.0
      %49 = vst [vmem:[#allocation2 + $0x8] sm:$0xff] 0.0
    $region25: #{tpu_custom_call.1} parent=1 // pred_fallthru
      _
    %v50 = vld [vmem:[#allocation2] sm:$0xff]
    %v51 = vld [vmem:[#allocation2 + $0x8] sm:$0xff]
    %v52 = vld [vmem:[#allocation3] sm:$0xf]
    %v53 = vld [vmem:[#allocation3 + $0x4] sm:$0xf]
    %v54 = vld [vmem:[#allocation6] sm:$0xf]
    %v55 = vld [vmem:[#allocation6 + $0x4] sm:$0xf]
    %v56 = vld [vmem:[#allocation6 + $0x8] sm:$0xf]
    %v57 = vld [vmem:[#allocation6 + $0xc] sm:$0xf]
    %v58 = vld [vmem:[#allocation6 + $0x10] sm:$0xf]
    %v59 = vld [vmem:[#allocation6 + $0x14] sm:$0xf]
    %v60 = vld [vmem:[#allocation6 + $0x18] sm:$0xf]
    %v61 = vld [vmem:[#allocation6 + $0x1c] sm:$0xf]
    %v62 = vld [vmem:[#allocation6 + $0x20] sm:$0xf]
    %v63 = vld [vmem:[#allocation6 + $0x24] sm:$0xf]
    %v64 = vld [vmem:[#allocation6 + $0x28] sm:$0xf]
    %v65 = vld [vmem:[#allocation6 + $0x2c] sm:$0xf]
    %v66 = vld [vmem:[#allocation6 + $0x30] sm:$0xf]
    %v67 = vld [vmem:[#allocation6 + $0x34] sm:$0xf]
    %v68 = vld [vmem:[#allocation6 + $0x38] sm:$0xf]
    %v69 = vld [vmem:[#allocation6 + $0x3c] sm:$0xf]
    %v72 = vunpack.c.l.b16 %v52
    %v73 = vunpack.c.l.b16 %v53
    %v74 = vpack.c.b16 %v73, %v72
    %v92 = vunpack.c.l.b16 %v54
    %v93 = vunpack.c.l.b16 %v55
    %v94 = vunpack.c.l.b16 %v56
    %v95 = vunpack.c.l.b16 %v57
    %v96 = vunpack.c.l.b16 %v58
    %v97 = vunpack.c.l.b16 %v59
    %v98 = vunpack.c.l.b16 %v60
    %v99 = vunpack.c.l.b16 %v61
    %v100 = vunpack.c.l.b16 %v62
    %v101 = vunpack.c.l.b16 %v63
    %v102 = vunpack.c.l.b16 %v64
    %v103 = vunpack.c.l.b16 %v65
    %v104 = vunpack.c.l.b16 %v66
    %v105 = vunpack.c.l.b16 %v67
    %v106 = vunpack.c.l.b16 %v68
    %v107 = vunpack.c.l.b16 %v69
    %v108 = vpack.c.b16 %v93, %v92
    %v109 = vpack.c.b16 %v95, %v94
    %v110 = vpack.c.b16 %v97, %v96
    %v111 = vpack.c.b16 %v99, %v98
    %v112 = vpack.c.b16 %v101, %v100
    %v113 = vpack.c.b16 %v103, %v102
    %v114 = vpack.c.b16 %v105, %v104
    %v115 = vpack.c.b16 %v107, %v106
    %124 = vmatprep.subr.bf16.mxu0 0
    %125 = vmatpush1.bf16.msra.mxu0 %v108
    %126 = vmatprep.subr.bf16.mxu0 0
    %127 = vmatpush1.bf16.msra.mxu0 %v109
    %128 = vmatprep.subr.bf16.mxu0 0
    %129 = vmatpush1.bf16.msra.mxu0 %v110
    %130 = vmatprep.subr.bf16.mxu0 0
    %131 = vmatpush1.bf16.msra.mxu0 %v111
    %132 = vmatprep.subr.bf16.mxu0 0
    %133 = vmatpush1.bf16.msra.mxu0 %v112
    %134 = vmatprep.subr.bf16.mxu0 0
    %135 = vmatpush1.bf16.msra.mxu0 %v113
    %136 = vmatprep.subr.bf16.mxu0 0
    %137 = vmatpush1.bf16.msra.mxu0 %v114
    %138 = vmatprep.subr.bf16.mxu0 0
    %139 = vmatpush1.bf16.msra.mxu0 %v115
    %140 = vmatprep.subr.bf16.mxu0 0
    %141 = vmatpush1.bf16.msra.mxu0 0
    %142 = vmatprep.subr.bf16.mxu0 0
    %143 = vmatpush1.bf16.msra.mxu0 0
    %144 = vmatprep.subr.bf16.mxu0 0
    %145 = vmatpush1.bf16.msra.mxu0 0
    %146 = vmatprep.subr.bf16.mxu0 0
    %147 = vmatpush1.bf16.msra.mxu0 0
    %148 = vmatprep.subr.bf16.mxu0 0
    %149 = vmatpush1.bf16.msra.mxu0 0
    %150 = vmatprep.subr.bf16.mxu0 0
    %151 = vmatpush1.bf16.msra.mxu0 0
    %152 = vmatprep.subr.bf16.mxu0 0
    %153 = vmatpush1.bf16.msra.mxu0 0
    %154 = vmatprep.subr.bf16.mxu0 0
    %155 = vmatpush1.bf16.msra.mxu0 0
    %156 = vmatprep.mubr.bf16.mxu0 0
    %157 = vmatmul.mubr.bf16.gmra.mrb[0].mxu0 %v74
    %v158 = vpop.f32.mrb[0].mxu0
    %v159 = vadd.f32 0.0, %v158
    %v160 = vpop.f32.mrb[0].mxu0
    %v161 = vpop.f32.mrb[0].mxu0
    %v162 = vadd.f32 0.0, %v161
    %v163 = vpop.f32.mrb[0].mxu0
    %164 = vdwg.mxu0
    %v165 = vadd.f32 %v50, %v159
    %v166 = vadd.f32 %v51, %v162
    %167 = vst [vmem:[#allocation2] sm:$0xff] %v165
    %168 = vst [vmem:[#allocation2 + $0x8] sm:$0xff] %v166
    // Predicated region
    $region26: #{tpu_custom_call.1} parent=1 // pred_check
      %p169 = pneg %p44
    $region27: #{tpu_custom_call.1} parent=1 // pred_check_branch
      %171 = sbr.rel (%p169) target = $region29
    $region28: #{tpu_custom_call.1} parent=1 // pred_region
      %v172 = vld [vmem:[#allocation2] sm:$0xff]
      %v173 = vld [vmem:[#allocation2 + $0x8] sm:$0xff]
      %v174 = vld [vmem:[%s2] sm:$0x1]
      %v176 = vlaneseq
      %v177 = vshrl.u32 %v176, 7
      %v178 = vsub.s32 0, %v177
      %v179 = vrot.slane %v174, %v178
      %v181 = vadd.f32 %v172, %v179
      %v182 = vadd.f32 %v173, %v179
      %v183 = vmax.f32 %v181, 0.0
      %v184 = vmax.f32 %v182, 0.0
      %185 = vst [vmem:[#allocation8] sm:$0xff] %v183
      %186 = vst [vmem:[#allocation8 + $0x8] sm:$0xff] %v184
    $region29: #{tpu_custom_call.1} parent=1 // pred_fallthru
      _
    // Predicated region
    $region30: #{tpu_custom_call.1} parent=1 // pred_check
      _
    $region31: #{tpu_custom_call.1} parent=1 // pred_check_branch
      %188 = sbr.rel (0) target = $region33
    $region32: #{tpu_custom_call.1} parent=1 // pred_region
      %s190 = ssub.s32 256, 256
      %191 = vsyncadd [#allocation5], %s190
      %s192 = sshll.u32 [#allocation8], 4
      %s193 = int_to_ptr.vmem [resolvable:$true] %s192
      %198 = dma.vmem_to_hbm [thread:$0]  %s193, 256, %s3, [#allocation5], 128, 128, 8
    $region33: #{tpu_custom_call.1} parent=1 // pred_fallthru
      _
    // Predicated region
    $region34: #{tpu_custom_call.1} parent=1 // pred_check
      _
    $region35: #{tpu_custom_call.1} parent=1 // pred_check_branch
      %200 = sbr.rel (0) target = $region37
    $region36: #{tpu_custom_call.1} parent=1 // pred_region
      %201 = dma.done [#allocation5], 256
    $region37: #{tpu_custom_call.1} parent=1 // pred_fallthru
      _
    %202 = vsyncpa [#allocation4], 1
    %203 = vsyncpa [#allocation7], 1
    %204 = vsyncpa [#allocation5], 1

</llo_original>
